<compile_context>
chip_gen: v6e
topology: v6e:2x2x1
jax: 0.10.0
libtpu: 0.0.40
codegen_flags: <defaults>
</compile_context>

<pallas_src>
import math
import functools

import jax
import jax.numpy as jnp
from jax.experimental import pallas as pl
from jax.experimental.pallas import tpu as pltpu


# ---------------------------------------------------------------------------
# Kernel 1: projection  x = h @ W   (once; not inside the adjacency loop)
# ---------------------------------------------------------------------------
def _proj_kernel(h_ref, w_ref, x_ref):
    # h_ref: (tm, IN), w_ref: (IN, OUT), x_ref: (tm, OUT) in bf16
    x = jnp.dot(h_ref[...], w_ref[...], preferred_element_type=jnp.float32)
    x_ref[...] = x.astype(x_ref.dtype)


def _project(h, W, *, tm, out_dtype=jnp.bfloat16):
    N, IN = h.shape
    OUT = W.shape[1]
    assert N % tm == 0
    return pl.pallas_call(
        _proj_kernel,
        out_shape=jax.ShapeDtypeStruct((N, OUT), out_dtype),
        grid_spec=pltpu.PrefetchScalarGridSpec(
            num_scalar_prefetch=0,
            grid=(N // tm,),
            in_specs=[
                pl.BlockSpec((tm, IN), lambda i: (i, 0)),    # h row-block
                pl.BlockSpec((IN, OUT), lambda i: (0, 0)),   # W (full, small)
            ],
            out_specs=pl.BlockSpec((tm, OUT), lambda i: (i, 0)),
        ),
        compiler_params=pltpu.CompilerParams(
            dimension_semantics=("parallel",),
            vmem_limit_bytes=32 * 1024 * 1024,
        ),
        cost_estimate=pl.CostEstimate(
            flops=2 * N * IN * OUT,
            transcendentals=0,
            bytes_accessed=(N * IN + IN * OUT) * 4 + N * OUT * 2,
        ),
    )(h, W)


# ---------------------------------------------------------------------------
# Kernel 2: aggregation  out = relu(clamp(adj, max=1) @ x + b)   (K-tiled)
# ---------------------------------------------------------------------------
def _agg_kernel(adj_ref, x_ref, b_ref, o_ref, acc_ref):
    # adj_ref: (tm, tk) f32   x_ref: (tk, OUT) bf16   b_ref: (1, OUT) f32
    # o_ref:   (tm, OUT)      acc_ref: (tm, OUT) f32 scratch (accumulator)
    k = pl.program_id(1)

    @pl.when(k == 0)
    def _():
        acc_ref[...] = jnp.zeros_like(acc_ref)

    # clamp in f32 (v5e VPU has no bf16 ALU), then bf16 operands on the MXU
    # with f32 accumulation.
    adj = jnp.minimum(adj_ref[...], 1.0).astype(jnp.bfloat16)
    acc_ref[...] += jnp.dot(adj, x_ref[...], preferred_element_type=jnp.float32)

    @pl.when(k == pl.num_programs(1) - 1)
    def _():
        y = acc_ref[...] + b_ref[...].astype(jnp.float32)   # bias broadcast
        o_ref[...] = jnp.maximum(y, 0.0).astype(o_ref.dtype)  # ReLU


@functools.partial(jax.jit, static_argnames=("tm", "tk"))
def gcn_layer(h, adj, W, b, *, tm=128, tk=128):
    N, IN = h.shape
    OUT = W.shape[1]
    assert adj.shape == (N, N)
    # TODO(synk): ragged N (not a multiple of the tiles) would need padding/masking.
    assert N % tm == 0 and N % tk == 0

    # --- projection hoisted out of the adjacency loop (computed once) -------
    x = _project(h, W, tm=tm, out_dtype=jnp.bfloat16)

    # --- K-tiled aggregation -------------------------------------------------
    grid = (N // tm, N // tk)
    out = pl.pallas_call(
        _agg_kernel,
        out_shape=jax.ShapeDtypeStruct((N, OUT), h.dtype),
        grid_spec=pltpu.PrefetchScalarGridSpec(
            num_scalar_prefetch=0,
            grid=grid,
            in_specs=[
                pl.BlockSpec((tm, tk), lambda i, k: (i, k)),    # adj tile
                pl.BlockSpec((tk, OUT), lambda i, k: (k, 0)),   # x K-slab (bf16)
                pl.BlockSpec((1, OUT), lambda i, k: (0, 0)),    # bias
            ],
            out_specs=pl.BlockSpec((tm, OUT), lambda i, k: (i, 0)),
            scratch_shapes=[pltpu.VMEM((tm, OUT), jnp.float32)],
        ),
        compiler_params=pltpu.CompilerParams(
            dimension_semantics=("parallel", "arbitrary"),
            vmem_limit_bytes=32 * 1024 * 1024,
        ),
        cost_estimate=pl.CostEstimate(
            flops=2 * N * N * OUT,
            transcendentals=0,
            bytes_accessed=N * N * 4 + N * OUT * 2 + OUT * 4 + N * OUT * 4,
        ),
    )(adj, x, b)
    return out


def init_params(key, input_dim, output_dim):
    """Xavier-uniform W, zero bias — matches GCNLayer.init_params()."""
    bound = math.sqrt(6.0 / (input_dim + output_dim))
    W = jax.random.uniform(key, (input_dim, output_dim),
                           minval=-bound, maxval=bound, dtype=jnp.float32)
    b = jnp.zeros((1, output_dim), dtype=jnp.float32)
    return W, b


if __name__ == "__main__":
    # Small deterministic example consistent with the module's forward:
    # N nodes, input_dim -> output_dim projection, dense adjacency.
    N, INPUT_DIM, OUTPUT_DIM = 256, 32, 128

    key = jax.random.PRNGKey(0)
    k_h, k_adj, k_w = jax.random.split(key, 3)

    h = jax.random.normal(k_h, (N, INPUT_DIM), dtype=jnp.float32)
    # adjacency with values in [0, 2) so the clamp(max=1) actually matters
    adj = jax.random.uniform(k_adj, (N, N), minval=0.0, maxval=2.0,
                             dtype=jnp.float32)

    W, b = init_params(k_w, INPUT_DIM, OUTPUT_DIM)
    # TODO(synk): dropout is identity in eval mode; training-time dropout mask
    # (pltpu.prng_random_bits) not implemented here.

    out = gcn_layer(h, adj, W, b, tm=128, tk=128)
    jax.block_until_ready(out)
    assert out.shape == (N, OUTPUT_DIM)

    # Reference 1: mirror the kernel's bf16 MXU-operand quantization (tight-ish).
    x_hp = jnp.dot(h, W, precision=jax.lax.Precision.HIGHEST)
    ref_bf16 = jnp.maximum(
        jnp.dot(jnp.minimum(adj, 1.0).astype(jnp.bfloat16),
                x_hp.astype(jnp.bfloat16),
                preferred_element_type=jnp.float32) + b,
        0.0)
    assert jnp.allclose(out, ref_bf16, atol=5e-2, rtol=5e-2), (
        float(jnp.max(jnp.abs(out - ref_bf16))))

    # Reference 2: pure f32 semantics of the PyTorch module (looser tolerance
    # because the kernel feeds the MXU bf16 operands with f32 accumulation).
    ref_f32 = jnp.maximum(jnp.minimum(adj, 1.0) @ (h @ W) + b, 0.0)
    assert jnp.allclose(out, ref_f32, atol=3e-1, rtol=5e-2), (
        float(jnp.max(jnp.abs(out - ref_f32))))

    print("KERNEL_OK")
</pallas_src>

<mosaic_0001>
module attributes {stable_mosaic.version = 11 : i64} {
  func.func @_agg_kernel(%arg0: i32, %arg1: i32, %arg2: memref<128x128xf32, #tpu.memory_space<vmem>>, %arg3: memref<128x128xbf16, #tpu.memory_space<vmem>>, %arg4: memref<1x128xf32, #tpu.memory_space<vmem>>, %arg5: memref<128x128xf32, #tpu.memory_space<vmem>>, %arg6: memref<128x128xf32, #tpu.memory_space<vmem>>) attributes {dimension_semantics = [#tpu.dimension_semantics<parallel>, #tpu.dimension_semantics<arbitrary>], iteration_bounds = array<i64: 2, 2>, scalar_prefetch = 0 : i64, scratch_operands = 1 : i64, tpu.core_type = #tpu.core_type<tc>, window_params = [{transform_indices = @transform_0, window_bounds = array<i64: 128, 128>}, {transform_indices = @transform_1, window_bounds = array<i64: 128, 128>}, {pipeline_mode = #tpu.pipeline_mode<synchronous>, transform_indices = @transform_2, window_bounds = array<i64: 1, 128>}, {transform_indices = @transform_3, window_bounds = array<i64: 128, 128>}]} {
    %c0_i32 = arith.constant 0 : i32
    %0 = arith.cmpi eq, %arg1, %c0_i32 : i32
    %1 = arith.extui %0 : i1 to i32
    %c0_i32_0 = arith.constant 0 : i32
    %2 = arith.cmpi ne, %1, %c0_i32_0 : i32
    scf.if %2 {
      %cst_10 = arith.constant 0.000000e+00 : f32
      %15 = vector.broadcast %cst_10 : f32 to vector<128x128xf32>
      %c0_11 = arith.constant 0 : index
      %c0_12 = arith.constant 0 : index
      %16 = vector.load %arg6[%c0_11, %c0_12] : memref<128x128xf32, #tpu.memory_space<vmem>>, vector<128x128xf32>
      tpu.vector_store %arg6[%c0_11, %c0_12], %15 {strides = array<i32>} : memref<128x128xf32, #tpu.memory_space<vmem>>, vector<128x128xf32>,
    } else {
    }
    %c0 = arith.constant 0 : index
    %c0_1 = arith.constant 0 : index
    %3 = vector.load %arg2[%c0, %c0_1] : memref<128x128xf32, #tpu.memory_space<vmem>>, vector<128x128xf32>
    %cst = arith.constant 1.000000e+00 : f32
    %4 = vector.broadcast %cst : f32 to vector<128x128xf32>
    %5 = arith.minimumf %3, %4 : vector<128x128xf32>
    %6 = arith.truncf %5 : vector<128x128xf32> to vector<128x128xbf16>
    %c0_2 = arith.constant 0 : index
    %c0_3 = arith.constant 0 : index
    %7 = vector.load %arg6[%c0_2, %c0_3] : memref<128x128xf32, #tpu.memory_space<vmem>>, vector<128x128xf32>
    %c0_4 = arith.constant 0 : index
    %c0_5 = arith.constant 0 : index
    %8 = vector.load %arg3[%c0_4, %c0_5] : memref<128x128xbf16, #tpu.memory_space<vmem>>, vector<128x128xbf16>
    %cst_6 = arith.constant dense<0.000000e+00> : vector<128x128xf32>
    %9 = tpu.matmul %6, %8, %cst_6 {dimension_numbers = #tpu.dot_dimension_numbers<[1], [0], [0], [1], [0, 0, 1, 1], [], []>} : vector<128x128xbf16>, vector<128x128xbf16>, vector<128x128xf32> -> vector<128x128xf32>
    %10 = arith.addf %7, %9 : vector<128x128xf32>
    %c0_7 = arith.constant 0 : index
    %c0_8 = arith.constant 0 : index
    %11 = vector.load %arg6[%c0_7, %c0_8] : memref<128x128xf32, #tpu.memory_space<vmem>>, vector<128x128xf32>
    tpu.vector_store %arg6[%c0_7, %c0_8], %10 {strides = array<i32>} : memref<128x128xf32, #tpu.memory_space<vmem>>, vector<128x128xf32>,
    %c1_i32 = arith.constant 1 : i32
    %12 = arith.cmpi eq, %arg1, %c1_i32 : i32
    %13 = arith.extui %12 : i1 to i32
    %c0_i32_9 = arith.constant 0 : i32
    %14 = arith.cmpi ne, %13, %c0_i32_9 : i32
    scf.if %14 {
      %c0_10 = arith.constant 0 : index
      %c0_11 = arith.constant 0 : index
      %15 = vector.load %arg6[%c0_10, %c0_11] : memref<128x128xf32, #tpu.memory_space<vmem>>, vector<128x128xf32>
      %c0_12 = arith.constant 0 : index
      %c0_13 = arith.constant 0 : index
      %16 = vector.load %arg4[%c0_12, %c0_13] : memref<1x128xf32, #tpu.memory_space<vmem>>, vector<1x128xf32>
      %17 = vector.broadcast %16 : vector<1x128xf32> to vector<128x128xf32>
      %18 = arith.addf %15, %17 : vector<128x128xf32>
      %cst_14 = arith.constant 0.000000e+00 : f32
      %19 = vector.broadcast %cst_14 : f32 to vector<128x128xf32>
      %20 = arith.maximumf %18, %19 : vector<128x128xf32>
      %c0_15 = arith.constant 0 : index
      %c0_16 = arith.constant 0 : index
      %21 = vector.load %arg5[%c0_15, %c0_16] : memref<128x128xf32, #tpu.memory_space<vmem>>, vector<128x128xf32>
      tpu.vector_store %arg5[%c0_15, %c0_16], %20 {strides = array<i32>} : memref<128x128xf32, #tpu.memory_space<vmem>>, vector<128x128xf32>,
    } else {
    }
    return
  }
  func.func @transform_0(%arg0: i32, %arg1: i32) -> (i32, i32) {
    %c0_i32 = arith.constant 0 : i32
    return %arg0, %arg1 : i32, i32
  }
  func.func @transform_1(%arg0: i32, %arg1: i32) -> (i32, i32) {
    %c0_i32 = arith.constant 0 : i32
    %c0_i32_0 = arith.constant 0 : i32
    return %arg1, %c0_i32 : i32, i32
  }
  func.func @transform_2(%arg0: i32, %arg1: i32) -> (i32, i32) {
    %c0_i32 = arith.constant 0 : i32
    %c0_i32_0 = arith.constant 0 : i32
    %c0_i32_1 = arith.constant 0 : i32
    return %c0_i32, %c0_i32_0 : i32, i32
  }
  func.func @transform_3(%arg0: i32, %arg1: i32) -> (i32, i32) {
    %c0_i32 = arith.constant 0 : i32
    %c0_i32_0 = arith.constant 0 : i32
    return %arg0, %c0_i32 : i32, i32
  }
}

module attributes {stable_mosaic.version = 11 : i64} {
  func.func @_proj_kernel(%arg0: i32, %arg1: memref<128x32xf32, #tpu.memory_space<vmem>>, %arg2: memref<32x128xf32, #tpu.memory_space<vmem>>, %arg3: memref<128x128xbf16, #tpu.memory_space<vmem>>) attributes {dimension_semantics = [#tpu.dimension_semantics<parallel>], iteration_bounds = array<i64: 2>, scalar_prefetch = 0 : i64, scratch_operands = 0 : i64, tpu.core_type = #tpu.core_type<tc>, window_params = [{transform_indices = @transform_0, window_bounds = array<i64: 128, 32>}, {pipeline_mode = #tpu.pipeline_mode<synchronous>, transform_indices = @transform_1, window_bounds = array<i64: 32, 128>}, {transform_indices = @transform_2, window_bounds = array<i64: 128, 128>}]} {
    %c0 = arith.constant 0 : index
    %c0_0 = arith.constant 0 : index
    %0 = vector.load %arg1[%c0, %c0_0] : memref<128x32xf32, #tpu.memory_space<vmem>>, vector<128x32xf32>
    %c0_1 = arith.constant 0 : index
    %c0_2 = arith.constant 0 : index
    %1 = vector.load %arg2[%c0_1, %c0_2] : memref<32x128xf32, #tpu.memory_space<vmem>>, vector<32x128xf32>
    %cst = arith.constant dense<0.000000e+00> : vector<128x128xf32>
    %2 = tpu.matmul %0, %1, %cst {dimension_numbers = #tpu.dot_dimension_numbers<[1], [0], [0], [1], [0, 0, 1, 1], [], []>} : vector<128x32xf32>, vector<32x128xf32>, vector<128x128xf32> -> vector<128x128xf32>
    %3 = arith.truncf %2 : vector<128x128xf32> to vector<128x128xbf16>
    %c0_3 = arith.constant 0 : index
    %c0_4 = arith.constant 0 : index
    %4 = vector.load %arg3[%c0_3, %c0_4] : memref<128x128xbf16, #tpu.memory_space<vmem>>, vector<128x128xbf16>
    tpu.vector_store %arg3[%c0_3, %c0_4], %3 {strides = array<i32>} : memref<128x128xbf16, #tpu.memory_space<vmem>>, vector<128x128xbf16>,
    return
  }
  func.func @transform_0(%arg0: i32) -> (i32, i32) {
    %c0_i32 = arith.constant 0 : i32
    %c0_i32_0 = arith.constant 0 : i32
    return %arg0, %c0_i32 : i32, i32
  }
  func.func @transform_1(%arg0: i32) -> (i32, i32) {
    %c0_i32 = arith.constant 0 : i32
    %c0_i32_0 = arith.constant 0 : i32
    %c0_i32_1 = arith.constant 0 : i32
    return %c0_i32, %c0_i32_0 : i32, i32
  }
  func.func @transform_2(%arg0: i32) -> (i32, i32) {
    %c0_i32 = arith.constant 0 : i32
    %c0_i32_0 = arith.constant 0 : i32
    return %arg0, %c0_i32 : i32, i32
  }
}

</mosaic_0001>

<llo_original>
// kernel: gcn_layer.3
$region0: #{gcn_layer.3}
  #allocation0 [shape = 'u32[]', space=smem, size = 0x4, offset = 0x4, fixed_abs, tag = 'smem constant byte address 0x4 - core index']
  #allocation1 [shape = 'u32[144,128]{1,0:T(1,128)}', space=vmem, size = 0x12000, scoped, tag = 'internal scratch']
  #allocation2 [shape = 'f32[128,128]{1,0:T(8,128)}', space=vmem, size = 0x10000, scoped, tag = 'scratch operand']
  %s0 = inlined_call_operand.vmem [shape: f32[256,256], index: 0, kind: input, shape index: {}]
  %s1 = inlined_call_operand.vmem [shape: bf16[256,128], index: 1, kind: input, shape index: {}]
  %s2 = inlined_call_operand.vmem [shape: f32[1,128], index: 2, kind: input, shape index: {}]
  %s3 = inlined_call_operand.hbm [shape: f32[256,128], index: 3, kind: output, shape index: {}]
  %s4 = sld [smem:[#allocation0]]
  $region91: #{gcn_layer.3} parent=0
    _
  %s6 = ssub.s32 1, %s4
  %s7 = scalar_select 0, %s6, %s4
  $region1: #{gcn_layer.3} parent=0
    #allocation3 [shape = 'u8[131072]{0}', space=vmem, size = 0x20000, scoped, tag = 'input window, operand 0']
    #allocation4 [shape = 'u8[131072]{0}', space=vmem, size = 0x20000, scoped, tag = 'output window, operand 0']
    #allocation5 [shape = 's32[2]{0}', space=sflag, size = 0x8, scoped, tag = 'scoped memory for gcn_layer.3']
    %8 = vsyncpa [#allocation5], 0
    %s9 = scalar_lea.sflag [#allocation5], 1
    %10 = vsyncpa %s9, 0
    loop: start=0, step=1, limit=6
    $region2: #{gcn_layer.3} parent=1 // loop_pre_header
      _
    $region3: #{gcn_layer.3} parent=1 // loop_header
      %s12 = sphi 0, %s16
      %p13 = scmp.ge.s32.totalorder %s12, 6
      %s19 = sphi 0, %s31
      %s20 = sphi 0, %s27
      %s21 = sphi 0, %s19
      %s22 = sphi 0, %s20
      %s23 = sphi 0, %s21
      %s24 = sphi 0, %s22
      %s36 = sphi 0, %s38
      %s39 = sphi 0, %s36
      %s40 = sphi 0, %s39
      %s56 = sphi 0, %s40
      %s62 = sphi 0, %s64
      %s65 = sphi 0, %s62
      %s66 = sphi 0, %s65
      %s82 = sphi 0, %s66
      %s86 = sphi 0, %s86
      %s88 = sphi 0, %s86
      %s89 = sphi 0, %s88
      %s103 = sphi 0, %s89
      %s109 = sphi 0, %s111
      %s112 = sphi 0, %s109
      %s113 = sphi 0, %s112
      %s129 = sphi 0, %s113
    $region4: #{gcn_layer.3} parent=1 // loop_header_branch
      %15 = sbr.rel (%p13) target = $region8
    $region5: #{gcn_layer.3} parent=1 // loop_body
      %s17 = ssub.s32 %s12, 1
      %s18 = ssub.s32 %s12, 2
      %s25 = sadd.s32 1, %s20
      %p26 = scmp.ge.s32.totalorder %s25, 2
      %s27 = scalar_select %p26, 0, %s25
      %s28 = sadd.s32 1, %s19
      %s29 = scalar_select %p26, %s28, %s19
      %p30 = scmp.ge.s32.totalorder %s29, 2
      %s31 = scalar_select %p30, 0, %s29
      %s32 = ssub.s32 %s19, %s31
      %s33 = ssub.s32 %s20, %s27
      %s34 = sor.u32 %s32, %s33
      %p35 = scmp.eq.s32.totalorder %s34, 0
      %s37 = sadd.s32 %s36, 1
      %s38 = scalar_select %p35, %s36, %s37
      %p41 = pneg %p35
      %p42 = scmp.eq.s32.totalorder %s12, 3
      %p43 = por %p41, %p42
      %p44 = scmp.ne.s32.totalorder %s36, %s39
      %p45 = scmp.eq.s32.totalorder %s12, 0
      %p46 = por %p44, %p45
      %p47 = scmp.ne.s32.totalorder %s36, %s39
      %p48 = scmp.eq.s32.totalorder %s17, 3
      %p49 = por %p47, %p48
      %p50 = scmp.ne.s32.totalorder %s39, %s40
      %p51 = scmp.eq.s32.totalorder %s17, 0
      %p52 = por %p50, %p51
      %p53 = scmp.ne.s32.totalorder %s39, %s40
      %p54 = scmp.eq.s32.totalorder %s18, 3
      %p55 = por %p53, %p54
      %p57 = scmp.ne.s32.totalorder %s40, %s56
      %p58 = scmp.eq.s32.totalorder %s18, 0
      %p59 = por %p57, %p58
      %s60 = ssub.s32 %s20, %s27
      %p61 = scmp.eq.s32.totalorder %s60, 0
      %s63 = sadd.s32 %s62, 1
      %s64 = scalar_select %p61, %s62, %s63
      %p67 = pneg %p61
      %p68 = scmp.eq.s32.totalorder %s12, 3
      %p69 = por %p67, %p68
      %p70 = scmp.ne.s32.totalorder %s62, %s65
      %p71 = scmp.eq.s32.totalorder %s12, 0
      %p72 = por %p70, %p71
      %p73 = scmp.ne.s32.totalorder %s62, %s65
      %p74 = scmp.eq.s32.totalorder %s17, 3
      %p75 = por %p73, %p74
      %p76 = scmp.ne.s32.totalorder %s65, %s66
      %p77 = scmp.eq.s32.totalorder %s17, 0
      %p78 = por %p76, %p77
      %p79 = scmp.ne.s32.totalorder %s65, %s66
      %p80 = scmp.eq.s32.totalorder %s18, 3
      %p81 = por %p79, %p80
      %p83 = scmp.ne.s32.totalorder %s66, %s82
      %p84 = scmp.eq.s32.totalorder %s18, 0
      %p85 = por %p83, %p84
      %s87 = sadd.s32 %s86, 1
      %p90 = scmp.eq.s32.totalorder %s12, 3
      %p91 = scmp.ne.s32.totalorder %s86, %s88
      %p92 = scmp.eq.s32.totalorder %s12, 0
      %p93 = por %p91, %p92
      %p94 = scmp.ne.s32.totalorder %s86, %s88
      %p95 = scmp.eq.s32.totalorder %s17, 3
      %p96 = por %p94, %p95
      %p97 = scmp.ne.s32.totalorder %s88, %s89
      %p98 = scmp.eq.s32.totalorder %s17, 0
      %p99 = por %p97, %p98
      %p100 = scmp.ne.s32.totalorder %s88, %s89
      %p101 = scmp.eq.s32.totalorder %s18, 3
      %p102 = por %p100, %p101
      %p104 = scmp.ne.s32.totalorder %s89, %s103
      %p105 = scmp.eq.s32.totalorder %s18, 0
      %p106 = por %p104, %p105
      %s107 = ssub.s32 %s19, %s31
      %p108 = scmp.eq.s32.totalorder %s107, 0
      %s110 = sadd.s32 %s109, 1
      %s111 = scalar_select %p108, %s109, %s110
      %p114 = pneg %p108
      %p115 = scmp.eq.s32.totalorder %s12, 3
      %p116 = por %p114, %p115
      %p117 = scmp.ne.s32.totalorder %s109, %s112
      %p118 = scmp.eq.s32.totalorder %s12, 0
      %p119 = por %p117, %p118
      %p120 = scmp.ne.s32.totalorder %s109, %s112
      %p121 = scmp.eq.s32.totalorder %s17, 3
      %p122 = por %p120, %p121
      %p123 = scmp.ne.s32.totalorder %s112, %s113
      %p124 = scmp.eq.s32.totalorder %s17, 0
      %p125 = por %p123, %p124
      %p126 = scmp.ne.s32.totalorder %s112, %s113
      %p127 = scmp.eq.s32.totalorder %s18, 3
      %p128 = por %p126, %p127
      %p130 = scmp.ne.s32.totalorder %s113, %s129
      %p131 = scmp.eq.s32.totalorder %s18, 0
      %p132 = por %p130, %p131
      %p133 = scmp.le.s32.totalorder 1, %s12
      %p134 = scmp.lt.s32.totalorder %s12, 5
      %p135 = pnand %p133, %p134
      %p136 = pneg %p135
      // Predicated region
      $region9: #{gcn_layer.3} parent=5 // pred_check
        _
      $region10: #{gcn_layer.3} parent=5 // pred_check_branch
        %138 = sbr.rel (%p135) target = $region12
      $region11: #{gcn_layer.3} parent=5 // pred_region
        %s139 = ssub.s32 %s12, 1
        // Predicated region
        $region13: #{gcn_layer.3} parent=11 // pred_check
          %p140 = pneg %p99
        $region14: #{gcn_layer.3} parent=11 // pred_check_branch
          %142 = sbr.rel (%p140) target = $region16
        $region15: #{gcn_layer.3} parent=11 // pred_region
          _
        $region16: #{gcn_layer.3} parent=11 // pred_fallthru
          _
      $region12: #{gcn_layer.3} parent=5 // pred_fallthru
        _
      %p143 = scmp.lt.s32.totalorder %s12, 4
      // Predicated region
      $region17: #{gcn_layer.3} parent=5 // pred_check
        %p144 = pneg %p143
      $region18: #{gcn_layer.3} parent=5 // pred_check_branch
        %146 = sbr.rel (%p144) target = $region20
      $region19: #{gcn_layer.3} parent=5 // pred_region
        // Predicated region
        $region21: #{gcn_layer.3} parent=19 // pred_check
          %p147 = pneg %p46
        $region22: #{gcn_layer.3} parent=19 // pred_check_branch
          %149 = sbr.rel (%p147) target = $region24
        $region23: #{gcn_layer.3} parent=19 // pred_region
          %s150 = sand.u32 %s36, 1
          %s151 = sand.u32 %s36, 1
          %s152 = smul.addr %s151, 128
          %s153 = scalar_lea.vmem [#allocation3], %s152
          %s154 = smul.u32 16, %s19
          %s155 = smul.addr %s154, 2
          %s156 = sadd.s32 %s20, %s155
          %s157 = smul.addr %s156, 8
          %s158 = scalar_lea.vmem %s0, %s157
          // Predicated region
          $region25: #{gcn_layer.3} parent=23 // pred_check
            _
          $region26: #{gcn_layer.3} parent=23 // pred_check_branch
            %160 = sbr.rel (0) target = $region28
          $region27: #{gcn_layer.3} parent=23 // pred_region
            // Predicated region
            $region29: #{gcn_layer.3} parent=27 // pred_check
              _
            $region30: #{gcn_layer.3} parent=27 // pred_check_branch
              %162 = sbr.rel (0) target = $region32
            $region31: #{gcn_layer.3} parent=27 // pred_region
              // Predicated region
              $region44: #{gcn_layer.3} parent=31 // pred_check
                _
              $region45: #{gcn_layer.3} parent=31 // pred_check_branch
                %208 = sbr.rel (0) target = $region47
              $region46: #{gcn_layer.3} parent=31 // pred_region
                loop: start=0, step=1, limit=1
                $region48: #{gcn_layer.3} parent=46 // loop_pre_header
                  _
                $region49: #{gcn_layer.3} parent=46 // loop_header
                  %s210 = sphi 0, %s214
                  %p211 = scmp.ge.s32.totalorder %s210, 1
                  %s215 = sphi %s158, %s158
                  %s216 = sphi %s153, %s153
                $region50: #{gcn_layer.3} parent=46 // loop_header_branch
                  %213 = sbr.rel (%p211) target = $region54
                $region51: #{gcn_layer.3} parent=46 // loop_body
                  %v217 = vld [vmem:[%s215] sm:$0xff]
                  %218 = vst [vmem:[%s216] sm:$0xff] %v217
                  %v219 = vld [vmem:[%s215 + $0x10] sm:$0xff]
                  %220 = vst [vmem:[%s216 + $0x8] sm:$0xff] %v219
                  %v221 = vld [vmem:[%s215 + $0x20] sm:$0xff]
                  %222 = vst [vmem:[%s216 + $0x10] sm:$0xff] %v221
                  %v223 = vld [vmem:[%s215 + $0x30] sm:$0xff]
                  %224 = vst [vmem:[%s216 + $0x18] sm:$0xff] %v223
                  %v225 = vld [vmem:[%s215 + $0x40] sm:$0xff]
                  %226 = vst [vmem:[%s216 + $0x20] sm:$0xff] %v225
                  %v227 = vld [vmem:[%s215 + $0x50] sm:$0xff]
                  %228 = vst [vmem:[%s216 + $0x28] sm:$0xff] %v227
                  %v229 = vld [vmem:[%s215 + $0x60] sm:$0xff]
                  %230 = vst [vmem:[%s216 + $0x30] sm:$0xff] %v229
                  %v231 = vld [vmem:[%s215 + $0x70] sm:$0xff]
                  %232 = vst [vmem:[%s216 + $0x38] sm:$0xff] %v231
                  %v233 = vld [vmem:[%s215 + $0x80] sm:$0xff]
                  %234 = vst [vmem:[%s216 + $0x40] sm:$0xff] %v233
                  %v235 = vld [vmem:[%s215 + $0x90] sm:$0xff]
                  %236 = vst [vmem:[%s216 + $0x48] sm:$0xff] %v235
                  %v237 = vld [vmem:[%s215 + $0xa0] sm:$0xff]
                  %238 = vst [vmem:[%s216 + $0x50] sm:$0xff] %v237
                  %v239 = vld [vmem:[%s215 + $0xb0] sm:$0xff]
                  %240 = vst [vmem:[%s216 + $0x58] sm:$0xff] %v239
                  %v241 = vld [vmem:[%s215 + $0xc0] sm:$0xff]
                  %242 = vst [vmem:[%s216 + $0x60] sm:$0xff] %v241
                  %v243 = vld [vmem:[%s215 + $0xd0] sm:$0xff]
                  %244 = vst [vmem:[%s216 + $0x68] sm:$0xff] %v243
                  %v245 = vld [vmem:[%s215 + $0xe0] sm:$0xff]
                  %246 = vst [vmem:[%s216 + $0x70] sm:$0xff] %v245
                  %v247 = vld [vmem:[%s215 + $0xf0] sm:$0xff]
                  %248 = vst [vmem:[%s216 + $0x78] sm:$0xff] %v247
                $region52: #{gcn_layer.3} parent=46 // loop_footer
                  %s214 = sadd.s32 1, %s210
                $region53: #{gcn_layer.3} parent=46 // loop_footer_branch
                  %209 = sbr.rel target = $region49
                $region54: #{gcn_layer.3} parent=46 // loop_exit
                  _
              $region47: #{gcn_layer.3} parent=31 // pred_fallthru
                _
              // Predicated region
              $region55: #{gcn_layer.3} parent=31 // pred_check
                _
              $region56: #{gcn_layer.3} parent=31 // pred_check_branch
                %250 = sbr.rel target = $region58
              $region57: #{gcn_layer.3} parent=31 // pred_region
                _
              $region58: #{gcn_layer.3} parent=31 // pred_fallthru
                _
            $region32: #{gcn_layer.3} parent=27 // pred_fallthru
              _
            // Predicated region
            $region33: #{gcn_layer.3} parent=27 // pred_check
              _
            $region34: #{gcn_layer.3} parent=27 // pred_check_branch
              %164 = sbr.rel target = $region36
            $region35: #{gcn_layer.3} parent=27 // pred_region
              %s166 = ssub.s32 256, 1
              loop: start=0, step=1, limit=1
              $region37: #{gcn_layer.3} parent=35 // loop_pre_header
                _
              $region38: #{gcn_layer.3} parent=35 // loop_header
                %s168 = sphi 0, %s172
                %p169 = scmp.ge.s32.totalorder %s168, 1
                %s173 = sphi %s158, %s158
                %s174 = sphi %s153, %s153
              $region39: #{gcn_layer.3} parent=35 // loop_header_branch
                %171 = sbr.rel (%p169) target = $region43
              $region40: #{gcn_layer.3} parent=35 // loop_body
                %v175 = vld [vmem:[%s173] sm:%s166]
                %176 = vst [vmem:[%s174] sm:%s166] %v175
                %v177 = vld [vmem:[%s173 + $0x10] sm:%s166]
                %178 = vst [vmem:[%s174 + $0x8] sm:%s166] %v177
                %v179 = vld [vmem:[%s173 + $0x20] sm:%s166]
                %180 = vst [vmem:[%s174 + $0x10] sm:%s166] %v179
                %v181 = vld [vmem:[%s173 + $0x30] sm:%s166]
                %182 = vst [vmem:[%s174 + $0x18] sm:%s166] %v181
                %v183 = vld [vmem:[%s173 + $0x40] sm:%s166]
                %184 = vst [vmem:[%s174 + $0x20] sm:%s166] %v183
                %v185 = vld [vmem:[%s173 + $0x50] sm:%s166]
                %186 = vst [vmem:[%s174 + $0x28] sm:%s166] %v185
                %v187 = vld [vmem:[%s173 + $0x60] sm:%s166]
                %188 = vst [vmem:[%s174 + $0x30] sm:%s166] %v187
                %v189 = vld [vmem:[%s173 + $0x70] sm:%s166]
                %190 = vst [vmem:[%s174 + $0x38] sm:%s166] %v189
                %v191 = vld [vmem:[%s173 + $0x80] sm:%s166]
                %192 = vst [vmem:[%s174 + $0x40] sm:%s166] %v191
                %v193 = vld [vmem:[%s173 + $0x90] sm:%s166]
                %194 = vst [vmem:[%s174 + $0x48] sm:%s166] %v193
                %v195 = vld [vmem:[%s173 + $0xa0] sm:%s166]
                %196 = vst [vmem:[%s174 + $0x50] sm:%s166] %v195
                %v197 = vld [vmem:[%s173 + $0xb0] sm:%s166]
                %198 = vst [vmem:[%s174 + $0x58] sm:%s166] %v197
                %v199 = vld [vmem:[%s173 + $0xc0] sm:%s166]
                %200 = vst [vmem:[%s174 + $0x60] sm:%s166] %v199
                %v201 = vld [vmem:[%s173 + $0xd0] sm:%s166]
                %202 = vst [vmem:[%s174 + $0x68] sm:%s166] %v201
                %v203 = vld [vmem:[%s173 + $0xe0] sm:%s166]
                %204 = vst [vmem:[%s174 + $0x70] sm:%s166] %v203
                %v205 = vld [vmem:[%s173 + $0xf0] sm:%s166]
                %206 = vst [vmem:[%s174 + $0x78] sm:%s166] %v205
              $region41: #{gcn_layer.3} parent=35 // loop_footer
                %s172 = sadd.s32 1, %s168
              $region42: #{gcn_layer.3} parent=35 // loop_footer_branch
                %167 = sbr.rel target = $region38
              $region43: #{gcn_layer.3} parent=35 // loop_exit
                _
            $region36: #{gcn_layer.3} parent=27 // pred_fallthru
              _
          $region28: #{gcn_layer.3} parent=23 // pred_fallthru
            _
          %251 = vnop
        $region24: #{gcn_layer.3} parent=19 // pred_fallthru
          _
        // Predicated region
        $region59: #{gcn_layer.3} parent=19 // pred_check
          %p252 = pneg %p72
        $region60: #{gcn_layer.3} parent=19 // pred_check_branch
          %254 = sbr.rel (%p252) target = $region62
        $region61: #{gcn_layer.3} parent=19 // pred_region
          %s255 = smul.u32 16, %s20
          %p256 = scmp.lt.s32.totalorder %s255, 31
          %s257 = scalar_select %p256, %s255, 31
          %s258 = smul.addr %s257, 4
          %s259 = scalar_lea.vmem %s1, %s258
          %s260 = smul.u32 16, %s20
        $region62: #{gcn_layer.3} parent=19 // pred_fallthru
          _
      $region20: #{gcn_layer.3} parent=5 // pred_fallthru
        _
      %p261 = scmp.le.s32.totalorder 1, %s12
      %p262 = scmp.lt.s32.totalorder %s12, 5
      %p263 = pnand %p261, %p262
      %p264 = pneg %p263
      // Predicated region
      $region63: #{gcn_layer.3} parent=5 // pred_check
        _
      $region64: #{gcn_layer.3} parent=5 // pred_check_branch
        %266 = sbr.rel (%p263) target = $region66
      $region65: #{gcn_layer.3} parent=5 // pred_region
        %s267 = ssub.s32 %s12, 1
        %s268 = sand.u32 %s39, 1
        %s269 = sand.u32 %s39, 1
        %s270 = smul.addr %s269, 128
        %s271 = scalar_lea.vmem [#allocation3], %s270
        // Predicated region
        $region67: #{gcn_layer.3} parent=65 // pred_check
          %p272 = pneg %p52
        $region68: #{gcn_layer.3} parent=65 // pred_check_branch
          %274 = sbr.rel (%p272) target = $region70
        $region69: #{gcn_layer.3} parent=65 // pred_region
          _
        $region70: #{gcn_layer.3} parent=65 // pred_fallthru
          _
        %s275 = sand.u32 %s39, 1
        %s276 = sand.u32 %s39, 1
        %s277 = smul.addr %s276, 128
        %s278 = scalar_lea.vmem [#allocation3], %s277
        %p279 = pneg %p52
        %p280 = pneg %p49
        %s281 = smul.u32 16, %s22
        %p282 = scmp.lt.s32.totalorder %s281, 31
        %s283 = scalar_select %p282, %s281, 31
        %s284 = smul.addr %s283, 4
        %s285 = scalar_lea.vmem %s1, %s284
        %p286 = pneg %p78
        %p287 = pneg %p75
        %p288 = pneg %p99
        %p289 = pneg %p96
        %p290 = pneg %p125
        %p291 = pneg %p122
        %s292 = sand.u32 %s112, 1
        %s293 = scalar_lea.sflag [#allocation5], %s292
        %s294 = sand.u32 %s112, 1
        %s295 = smul.addr %s294, 128
        %s296 = scalar_lea.vmem [#allocation4], %s295
        %s297 = smul.u32 16, %s21
        %s298 = smul.u32 16, %s22
        %p299 = scmp.lt.s32.totalorder %s298, 31
        %s300 = scalar_select %p299, %s298, 31
        %s301 = smul.addr %s300, 4
        %s302 = scalar_lea.vmem %s1, %s301
        %s303 = smul.u32 16, %s22
        %s304 = smul.u32 16, %s21
        %p306 = scmp.eq.s32.totalorder %s22, 0
        // Predicated region
        $region71: #{gcn_layer.3} parent=65 // pred_check
          %p307 = pneg %p306
        $region72: #{gcn_layer.3} parent=65 // pred_check_branch
          %309 = sbr.rel (%p307) target = $region74
        $region73: #{gcn_layer.3} parent=65 // pred_region
          %310 = vst [vmem:[#allocation2] sm:$0xff] 0.0
          %311 = vst [vmem:[#allocation2 + $0x8] sm:$0xff] 0.0
          %312 = vst [vmem:[#allocation2 + $0x10] sm:$0xff] 0.0
          %313 = vst [vmem:[#allocation2 + $0x18] sm:$0xff] 0.0
          %314 = vst [vmem:[#allocation2 + $0x20] sm:$0xff] 0.0
          %315 = vst [vmem:[#allocation2 + $0x28] sm:$0xff] 0.0
          %316 = vst [vmem:[#allocation2 + $0x30] sm:$0xff] 0.0
          %317 = vst [vmem:[#allocation2 + $0x38] sm:$0xff] 0.0
          %318 = vst [vmem:[#allocation2 + $0x40] sm:$0xff] 0.0
          %319 = vst [vmem:[#allocation2 + $0x48] sm:$0xff] 0.0
          %320 = vst [vmem:[#allocation2 + $0x50] sm:$0xff] 0.0
          %321 = vst [vmem:[#allocation2 + $0x58] sm:$0xff] 0.0
          %322 = vst [vmem:[#allocation2 + $0x60] sm:$0xff] 0.0
          %323 = vst [vmem:[#allocation2 + $0x68] sm:$0xff] 0.0
          %324 = vst [vmem:[#allocation2 + $0x70] sm:$0xff] 0.0
          %325 = vst [vmem:[#allocation2 + $0x78] sm:$0xff] 0.0
        $region74: #{gcn_layer.3} parent=65 // pred_fallthru
          _
        %v326 = vld [vmem:[%s271] sm:$0xff]
        %v327 = vld [vmem:[%s271 + $0x8] sm:$0xff]
        %v328 = vld [vmem:[%s271 + $0x10] sm:$0xff]
        %v329 = vld [vmem:[%s271 + $0x18] sm:$0xff]
        %v330 = vld [vmem:[%s271 + $0x20] sm:$0xff]
        %v331 = vld [vmem:[%s271 + $0x28] sm:$0xff]
        %v332 = vld [vmem:[%s271 + $0x30] sm:$0xff]
        %v333 = vld [vmem:[%s271 + $0x38] sm:$0xff]
        %v334 = vld [vmem:[%s271 + $0x40] sm:$0xff]
        %v335 = vld [vmem:[%s271 + $0x48] sm:$0xff]
        %v336 = vld [vmem:[%s271 + $0x50] sm:$0xff]
        %v337 = vld [vmem:[%s271 + $0x58] sm:$0xff]
        %v338 = vld [vmem:[%s271 + $0x60] sm:$0xff]
        %v339 = vld [vmem:[%s271 + $0x68] sm:$0xff]
        %v340 = vld [vmem:[%s271 + $0x70] sm:$0xff]
        %v341 = vld [vmem:[%s271 + $0x78] sm:$0xff]
        %v342 = vmin.f32 %v326, 1.0
        %v343 = vmin.f32 %v327, 1.0
        %v344 = vmin.f32 %v328, 1.0
        %v345 = vmin.f32 %v329, 1.0
        %v346 = vmin.f32 %v330, 1.0
        %v347 = vmin.f32 %v331, 1.0
        %v348 = vmin.f32 %v332, 1.0
        %v349 = vmin.f32 %v333, 1.0
        %v350 = vmin.f32 %v334, 1.0
        %v351 = vmin.f32 %v335, 1.0
        %v352 = vmin.f32 %v336, 1.0
        %v353 = vmin.f32 %v337, 1.0
        %v354 = vmin.f32 %v338, 1.0
        %v355 = vmin.f32 %v339, 1.0
        %v356 = vmin.f32 %v340, 1.0
        %v357 = vmin.f32 %v341, 1.0
        %v358 = vpack.c.bf16 %v343, %v342
        %v359 = vpack.c.bf16 %v345, %v344
        %v360 = vpack.c.bf16 %v347, %v346
        %v361 = vpack.c.bf16 %v349, %v348
        %v362 = vpack.c.bf16 %v351, %v350
        %v363 = vpack.c.bf16 %v353, %v352
        %v364 = vpack.c.bf16 %v355, %v354
        %v365 = vpack.c.bf16 %v357, %v356
        %v366 = vld [vmem:[#allocation2] sm:$0xff]
        %v367 = vld [vmem:[#allocation2 + $0x8] sm:$0xff]
        %v368 = vld [vmem:[#allocation2 + $0x10] sm:$0xff]
        %v369 = vld [vmem:[#allocation2 + $0x18] sm:$0xff]
        %v370 = vld [vmem:[#allocation2 + $0x20] sm:$0xff]
        %v371 = vld [vmem:[#allocation2 + $0x28] sm:$0xff]
        %v372 = vld [vmem:[#allocation2 + $0x30] sm:$0xff]
        %v373 = vld [vmem:[#allocation2 + $0x38] sm:$0xff]
        %v374 = vld [vmem:[#allocation2 + $0x40] sm:$0xff]
        %v375 = vld [vmem:[#allocation2 + $0x48] sm:$0xff]
        %v376 = vld [vmem:[#allocation2 + $0x50] sm:$0xff]
        %v377 = vld [vmem:[#allocation2 + $0x58] sm:$0xff]
        %v378 = vld [vmem:[#allocation2 + $0x60] sm:$0xff]
        %v379 = vld [vmem:[#allocation2 + $0x68] sm:$0xff]
        %v380 = vld [vmem:[#allocation2 + $0x70] sm:$0xff]
        %v381 = vld [vmem:[#allocation2 + $0x78] sm:$0xff]
        %v382 = vld [vmem:[%s302] sm:$0xf]
        %v383 = vld [vmem:[%s302 + $0x4] sm:$0xf]
        %v384 = vld [vmem:[%s302 + $0x8] sm:$0xf]
        %v385 = vld [vmem:[%s302 + $0xc] sm:$0xf]
        %v386 = vld [vmem:[%s302 + $0x10] sm:$0xf]
        %v387 = vld [vmem:[%s302 + $0x14] sm:$0xf]
        %v388 = vld [vmem:[%s302 + $0x18] sm:$0xf]
        %v389 = vld [vmem:[%s302 + $0x1c] sm:$0xf]
        %v390 = vld [vmem:[%s302 + $0x20] sm:$0xf]
        %v391 = vld [vmem:[%s302 + $0x24] sm:$0xf]
        %v392 = vld [vmem:[%s302 + $0x28] sm:$0xf]
        %v393 = vld [vmem:[%s302 + $0x2c] sm:$0xf]
        %v394 = vld [vmem:[%s302 + $0x30] sm:$0xf]
        %v395 = vld [vmem:[%s302 + $0x34] sm:$0xf]
        %v396 = vld [vmem:[%s302 + $0x38] sm:$0xf]
        %v397 = vld [vmem:[%s302 + $0x3c] sm:$0xf]
        %v414 = vunpack.c.l.b16 %v382
        %v415 = vunpack.c.l.b16 %v383
        %v416 = vunpack.c.l.b16 %v384
        %v417 = vunpack.c.l.b16 %v385
        %v418 = vunpack.c.l.b16 %v386
        %v419 = vunpack.c.l.b16 %v387
        %v420 = vunpack.c.l.b16 %v388
        %v421 = vunpack.c.l.b16 %v389
        %v422 = vunpack.c.l.b16 %v390
        %v423 = vunpack.c.l.b16 %v391
        %v424 = vunpack.c.l.b16 %v392
        %v425 = vunpack.c.l.b16 %v393
        %v426 = vunpack.c.l.b16 %v394
        %v427 = vunpack.c.l.b16 %v395
        %v428 = vunpack.c.l.b16 %v396
        %v429 = vunpack.c.l.b16 %v397
        %v430 = vpack.c.b16 %v415, %v414
        %v431 = vpack.c.b16 %v417, %v416
        %v432 = vpack.c.b16 %v419, %v418
        %v433 = vpack.c.b16 %v421, %v420
        %v434 = vpack.c.b16 %v423, %v422
        %v435 = vpack.c.b16 %v425, %v424
        %v436 = vpack.c.b16 %v427, %v426
        %v437 = vpack.c.b16 %v429, %v428
        %446 = vmatprep.subr.bf16.mxu0 0
        %447 = vmatpush1.bf16.msra.mxu0 %v437
        %448 = vmatprep.subr.bf16.mxu0 0
        %449 = vmatpush1.bf16.msra.mxu0 %v436
        %450 = vmatprep.subr.bf16.mxu0 0
        %451 = vmatpush1.bf16.msra.mxu0 %v435
        %452 = vmatprep.subr.bf16.mxu0 0
        %453 = vmatpush1.bf16.msra.mxu0 %v434
        %454 = vmatprep.subr.bf16.mxu0 0
        %455 = vmatpush1.bf16.msra.mxu0 %v433
        %456 = vmatprep.subr.bf16.mxu0 0
        %457 = vmatpush1.bf16.msra.mxu0 %v432
        %458 = vmatprep.subr.bf16.mxu0 0
        %459 = vmatpush1.bf16.msra.mxu0 %v431
        %460 = vmatprep.subr.bf16.mxu0 0
        %461 = vmatpush1.bf16.msra.mxu0 %v430
        %462 = vmatprep.subr.bf16.mxu0 0
        %463 = vmatpush2.bf16.msra.mxu0 0
        %464 = vmatprep.subr.bf16.mxu0 0
        %465 = vmatpush2.bf16.msra.mxu0 0
        %466 = vmatprep.subr.bf16.mxu0 0
        %467 = vmatpush2.bf16.msra.mxu0 0
        %468 = vmatprep.subr.bf16.mxu0 0
        %469 = vmatpush2.bf16.msra.mxu0 0
        %470 = vmatprep.subr.bf16.mxu0 0
        %471 = vmatpush2.bf16.msra.mxu0 0
        %472 = vmatprep.subr.bf16.mxu0 0
        %473 = vmatpush2.bf16.msra.mxu0 0
        %474 = vmatprep.subr.bf16.mxu0 0
        %475 = vmatpush2.bf16.msra.mxu0 0
        %476 = vmatprep.subr.bf16.mxu0 0
        %477 = vmatpush2.bf16.msra.mxu0 0
        %478 = vmatprep.mubr.bf16.mxu0 0
        %479 = vmatmul.mubr.bf16.gmra.mxu0 %v358
        %v480 = vpop.f32.mrf.mxu0
        %v481 = vadd.f32 0.0, %v480
        %v482 = vpop.f32.mrf.mxu0
        %v483 = vpop.f32.mrf.mxu0
        %v484 = vadd.f32 0.0, %v483
        %v485 = vpop.f32.mrf.mxu0
        %486 = vmatprep.mubr.bf16.mxu0 0
        %487 = vmatmul.mubr.bf16.gmra.mxu0 %v359
        %v488 = vpop.f32.mrf.mxu0
        %v489 = vadd.f32 0.0, %v488
        %v490 = vpop.f32.mrf.mxu0
        %v491 = vpop.f32.mrf.mxu0
        %v492 = vadd.f32 0.0, %v491
        %v493 = vpop.f32.mrf.mxu0
        %494 = vmatprep.mubr.bf16.mxu0 0
        %495 = vmatmul.mubr.bf16.gmra.mxu0 %v360
        %v496 = vpop.f32.mrf.mxu0
        %v497 = vadd.f32 0.0, %v496
        %v498 = vpop.f32.mrf.mxu0
        %v499 = vpop.f32.mrf.mxu0
        %v500 = vadd.f32 0.0, %v499
        %v501 = vpop.f32.mrf.mxu0
        %502 = vmatprep.mubr.bf16.mxu0 0
        %503 = vmatmul.mubr.bf16.gmra.mxu0 %v361
        %v504 = vpop.f32.mrf.mxu0
        %v505 = vadd.f32 0.0, %v504
        %v506 = vpop.f32.mrf.mxu0
        %v507 = vpop.f32.mrf.mxu0
        %v508 = vadd.f32 0.0, %v507
        %v509 = vpop.f32.mrf.mxu0
        %510 = vmatprep.mubr.bf16.mxu0 0
        %511 = vmatmul.mubr.bf16.gmra.mxu0 %v362
        %v512 = vpop.f32.mrf.mxu0
        %v513 = vadd.f32 0.0, %v512
        %v514 = vpop.f32.mrf.mxu0
        %v515 = vpop.f32.mrf.mxu0
        %v516 = vadd.f32 0.0, %v515
        %v517 = vpop.f32.mrf.mxu0
        %518 = vmatprep.mubr.bf16.mxu0 0
        %519 = vmatmul.mubr.bf16.gmra.mxu0 %v363
        %v520 = vpop.f32.mrf.mxu0
        %v521 = vadd.f32 0.0, %v520
        %v522 = vpop.f32.mrf.mxu0
        %v523 = vpop.f32.mrf.mxu0
        %v524 = vadd.f32 0.0, %v523
        %v525 = vpop.f32.mrf.mxu0
        %526 = vmatprep.mubr.bf16.mxu0 0
        %527 = vmatmul.mubr.bf16.gmra.mxu0 %v364
        %v528 = vpop.f32.mrf.mxu0
        %v529 = vadd.f32 0.0, %v528
        %v530 = vpop.f32.mrf.mxu0
        %v531 = vpop.f32.mrf.mxu0
        %v532 = vadd.f32 0.0, %v531
        %v533 = vpop.f32.mrf.mxu0
        %534 = vmatprep.mubr.bf16.mxu0 0
        %535 = vmatmul.mubr.bf16.gmra.mxu0 %v365
        %v536 = vpop.f32.mrf.mxu0
        %v537 = vadd.f32 0.0, %v536
        %v538 = vpop.f32.mrf.mxu0
        %v539 = vpop.f32.mrf.mxu0
        %v540 = vadd.f32 0.0, %v539
        %v541 = vpop.f32.mrf.mxu0
        %542 = vdwg.mxu0
        %v543 = vadd.f32 %v366, %v481
        %v544 = vadd.f32 %v367, %v484
        %v545 = vadd.f32 %v368, %v489
        %v546 = vadd.f32 %v369, %v492
        %v547 = vadd.f32 %v370, %v497
        %v548 = vadd.f32 %v371, %v500
        %v549 = vadd.f32 %v372, %v505
        %v550 = vadd.f32 %v373, %v508
        %v551 = vadd.f32 %v374, %v513
        %v552 = vadd.f32 %v375, %v516
        %v553 = vadd.f32 %v376, %v521
        %v554 = vadd.f32 %v377, %v524
        %v555 = vadd.f32 %v378, %v529
        %v556 = vadd.f32 %v379, %v532
        %v557 = vadd.f32 %v380, %v537
        %v558 = vadd.f32 %v381, %v540
        %559 = vst [vmem:[#allocation2] sm:$0xff] %v543
        %560 = vst [vmem:[#allocation2 + $0x8] sm:$0xff] %v544
        %561 = vst [vmem:[#allocation2 + $0x10] sm:$0xff] %v545
        %562 = vst [vmem:[#allocation2 + $0x18] sm:$0xff] %v546
        %563 = vst [vmem:[#allocation2 + $0x20] sm:$0xff] %v547
        %564 = vst [vmem:[#allocation2 + $0x28] sm:$0xff] %v548
        %565 = vst [vmem:[#allocation2 + $0x30] sm:$0xff] %v549
        %566 = vst [vmem:[#allocation2 + $0x38] sm:$0xff] %v550
        %567 = vst [vmem:[#allocation2 + $0x40] sm:$0xff] %v551
        %568 = vst [vmem:[#allocation2 + $0x48] sm:$0xff] %v552
        %569 = vst [vmem:[#allocation2 + $0x50] sm:$0xff] %v553
        %570 = vst [vmem:[#allocation2 + $0x58] sm:$0xff] %v554
        %571 = vst [vmem:[#allocation2 + $0x60] sm:$0xff] %v555
        %572 = vst [vmem:[#allocation2 + $0x68] sm:$0xff] %v556
        %573 = vst [vmem:[#allocation2 + $0x70] sm:$0xff] %v557
        %574 = vst [vmem:[#allocation2 + $0x78] sm:$0xff] %v558
        %p575 = scmp.eq.s32.totalorder %s22, 1
        // Predicated region
        $region75: #{gcn_layer.3} parent=65 // pred_check
          %p576 = pneg %p575
        $region76: #{gcn_layer.3} parent=65 // pred_check_branch
          %578 = sbr.rel (%p576) target = $region78
        $region77: #{gcn_layer.3} parent=65 // pred_region
          %v579 = vld [vmem:[#allocation2] sm:$0xff]
          %v580 = vld [vmem:[#allocation2 + $0x8] sm:$0xff]
          %v581 = vld [vmem:[#allocation2 + $0x10] sm:$0xff]
          %v582 = vld [vmem:[#allocation2 + $0x18] sm:$0xff]
          %v583 = vld [vmem:[#allocation2 + $0x20] sm:$0xff]
          %v584 = vld [vmem:[#allocation2 + $0x28] sm:$0xff]
          %v585 = vld [vmem:[#allocation2 + $0x30] sm:$0xff]
          %v586 = vld [vmem:[#allocation2 + $0x38] sm:$0xff]
          %v587 = vld [vmem:[#allocation2 + $0x40] sm:$0xff]
          %v588 = vld [vmem:[#allocation2 + $0x48] sm:$0xff]
          %v589 = vld [vmem:[#allocation2 + $0x50] sm:$0xff]
          %v590 = vld [vmem:[#allocation2 + $0x58] sm:$0xff]
          %v591 = vld [vmem:[#allocation2 + $0x60] sm:$0xff]
          %v592 = vld [vmem:[#allocation2 + $0x68] sm:$0xff]
          %v593 = vld [vmem:[#allocation2 + $0x70] sm:$0xff]
          %v594 = vld [vmem:[#allocation2 + $0x78] sm:$0xff]
          %v595 = vld [vmem:[%s2] sm:$0x1]
          %v597 = vlaneseq
          %v598 = vshrl.u32 %v597, 7
          %v599 = vsub.s32 0, %v598
          %v600 = vrot.slane %v595, %v599
          %v602 = vadd.f32 %v579, %v600
          %v603 = vadd.f32 %v580, %v600
          %v604 = vadd.f32 %v581, %v600
          %v605 = vadd.f32 %v582, %v600
          %v606 = vadd.f32 %v583, %v600
          %v607 = vadd.f32 %v584, %v600
          %v608 = vadd.f32 %v585, %v600
          %v609 = vadd.f32 %v586, %v600
          %v610 = vadd.f32 %v587, %v600
          %v611 = vadd.f32 %v588, %v600
          %v612 = vadd.f32 %v589, %v600
          %v613 = vadd.f32 %v590, %v600
          %v614 = vadd.f32 %v591, %v600
          %v615 = vadd.f32 %v592, %v600
          %v616 = vadd.f32 %v593, %v600
          %v617 = vadd.f32 %v594, %v600
          %v618 = vmax.f32 %v602, 0.0
          %v619 = vmax.f32 %v603, 0.0
          %v620 = vmax.f32 %v604, 0.0
          %v621 = vmax.f32 %v605, 0.0
          %v622 = vmax.f32 %v606, 0.0
          %v623 = vmax.f32 %v607, 0.0
          %v624 = vmax.f32 %v608, 0.0
          %v625 = vmax.f32 %v609, 0.0
          %v626 = vmax.f32 %v610, 0.0
          %v627 = vmax.f32 %v611, 0.0
          %v628 = vmax.f32 %v612, 0.0
          %v629 = vmax.f32 %v613, 0.0
          %v630 = vmax.f32 %v614, 0.0
          %v631 = vmax.f32 %v615, 0.0
          %v632 = vmax.f32 %v616, 0.0
          %v633 = vmax.f32 %v617, 0.0
          %634 = vst [vmem:[%s296] sm:$0xff] %v618
          %635 = vst [vmem:[%s296 + $0x8] sm:$0xff] %v619
          %636 = vst [vmem:[%s296 + $0x10] sm:$0xff] %v620
          %637 = vst [vmem:[%s296 + $0x18] sm:$0xff] %v621
          %638 = vst [vmem:[%s296 + $0x20] sm:$0xff] %v622
          %639 = vst [vmem:[%s296 + $0x28] sm:$0xff] %v623
          %640 = vst [vmem:[%s296 + $0x30] sm:$0xff] %v624
          %641 = vst [vmem:[%s296 + $0x38] sm:$0xff] %v625
          %642 = vst [vmem:[%s296 + $0x40] sm:$0xff] %v626
          %643 = vst [vmem:[%s296 + $0x48] sm:$0xff] %v627
          %644 = vst [vmem:[%s296 + $0x50] sm:$0xff] %v628
          %645 = vst [vmem:[%s296 + $0x58] sm:$0xff] %v629
          %646 = vst [vmem:[%s296 + $0x60] sm:$0xff] %v630
          %647 = vst [vmem:[%s296 + $0x68] sm:$0xff] %v631
          %648 = vst [vmem:[%s296 + $0x70] sm:$0xff] %v632
          %649 = vst [vmem:[%s296 + $0x78] sm:$0xff] %v633
        $region78: #{gcn_layer.3} parent=65 // pred_fallthru
          _
        %s650 = sand.u32 %s112, 1
        %s651 = scalar_lea.sflag [#allocation5], %s650
        %s652 = sand.u32 %s112, 1
        %s653 = smul.addr %s652, 128
        %s654 = scalar_lea.vmem [#allocation4], %s653
        // Predicated region
        $region79: #{gcn_layer.3} parent=65 // pred_check
          %p655 = pneg %p122
        $region80: #{gcn_layer.3} parent=65 // pred_check_branch
          %657 = sbr.rel (%p655) target = $region82
        $region81: #{gcn_layer.3} parent=65 // pred_region
          %s658 = smul.u32 16, %s21
          %s660 = ssub.s32 2048, 2048
          %661 = vsyncadd %s651, %s660
          %s662 = smul.addr %s658, 128
          %s663 = scalar_lea.hbm %s3, %s662
          %s664 = sshll.u32 %s654, 4
          %s665 = int_to_ptr.vmem [resolvable:$true] %s664
          %670 = dma.vmem_to_hbm [thread:$0]  %s665, 2048, %s663, %s651, 128, 128, 8
        $region82: #{gcn_layer.3} parent=65 // pred_fallthru
          _
      $region66: #{gcn_layer.3} parent=5 // pred_fallthru
        _
      %p671 = scmp.le.s32.totalorder 2, %s12
      // Predicated region
      $region83: #{gcn_layer.3} parent=5 // pred_check
        %p672 = pneg %p671
      $region84: #{gcn_layer.3} parent=5 // pred_check_branch
        %674 = sbr.rel (%p672) target = $region86
      $region85: #{gcn_layer.3} parent=5 // pred_region
        %s675 = ssub.s32 %s12, 2
        // Predicated region
        $region87: #{gcn_layer.3} parent=85 // pred_check
          %p676 = pneg %p128
        $region88: #{gcn_layer.3} parent=85 // pred_check_branch
          %678 = sbr.rel (%p676) target = $region90
        $region89: #{gcn_layer.3} parent=85 // pred_region
          %s679 = sand.u32 %s113, 1
          %s680 = scalar_lea.sflag [#allocation5], %s679
          %s681 = sand.u32 %s113, 1
          %s682 = smul.addr %s681, 128
          %s683 = scalar_lea.vmem [#allocation4], %s682
          %684 = dma.done %s680, 2048
        $region90: #{gcn_layer.3} parent=85 // pred_fallthru
          _
      $region86: #{gcn_layer.3} parent=5 // pred_fallthru
        _
    $region6: #{gcn_layer.3} parent=1 // loop_footer
      %s16 = sadd.s32 1, %s12
    $region7: #{gcn_layer.3} parent=1 // loop_footer_branch
      %11 = sbr.rel target = $region3
    $region8: #{gcn_layer.3} parent=1 // loop_exit
      _
    %685 = vsyncpa [#allocation5], 1
    %s686 = scalar_lea.sflag [#allocation5], 1
    %687 = vsyncpa %s686, 1

// kernel: gcn_layer.2
$region0: #{gcn_layer.2}
  #allocation0 [shape = 'u32[]', space=smem, size = 0x4, offset = 0x4, fixed_abs, tag = 'smem constant byte address 0x4 - core index']
  #allocation1 [shape = 'u32[144,128]{1,0:T(1,128)}', space=vmem, size = 0x12000, scoped, tag = 'internal scratch']
  %s0 = inlined_call_operand.vmem [shape: f32[256,32], index: 0, kind: input, shape index: {}]
  %s1 = inlined_call_operand.vmem [shape: f32[32,128], index: 1, kind: input, shape index: {}]
  %s2 = inlined_call_operand.vmem [shape: bf16[256,128], index: 2, kind: output, shape index: {}]
  %s3 = sld [smem:[#allocation0]]
  $region41: #{gcn_layer.2} parent=0
    _
  %s5 = ssub.s32 1, %s3
  %s6 = scalar_select 0, %s5, %s3
  loop: start=0, step=1, limit=4
  $region2: #{gcn_layer.2} parent=0 // loop_pre_header
    _
  $region3: #{gcn_layer.2} parent=0 // loop_header
    %s8 = sphi 0, %s12
    %p9 = scmp.ge.s32.totalorder %s8, 4
    %s18 = sphi 0, %s20
    %s21 = sphi 0, %s18
    %s22 = sphi 0, %s21
    %s38 = sphi 0, %s22
    %s42 = sphi 0, %s42
    %s44 = sphi 0, %s42
    %s45 = sphi 0, %s44
    %s59 = sphi 0, %s45
    %s65 = sphi 0, %s67
    %s68 = sphi 0, %s65
    %s69 = sphi 0, %s68
    %s85 = sphi 0, %s69
  $region4: #{gcn_layer.2} parent=0 // loop_header_branch
    %11 = sbr.rel (%p9) target = $region8
  $region5: #{gcn_layer.2} parent=0 // loop_body
    %s13 = ssub.s32 %s8, 1
    %s14 = ssub.s32 %s8, 2
    %s15 = sadd.s32 %s8, 1
    %s16 = ssub.s32 %s8, %s15
    %p17 = scmp.eq.s32.totalorder %s16, 0
    %s19 = sadd.s32 %s18, 1
    %s20 = scalar_select %p17, %s18, %s19
    %p23 = pneg %p17
    %p24 = scmp.eq.s32.totalorder %s8, 1
    %p25 = por %p23, %p24
    %p26 = scmp.ne.s32.totalorder %s18, %s21
    %p27 = scmp.eq.s32.totalorder %s8, 0
    %p28 = por %p26, %p27
    %p29 = scmp.ne.s32.totalorder %s18, %s21
    %p30 = scmp.eq.s32.totalorder %s13, 1
    %p31 = por %p29, %p30
    %p32 = scmp.ne.s32.totalorder %s21, %s22
    %p33 = scmp.eq.s32.totalorder %s13, 0
    %p34 = por %p32, %p33
    %p35 = scmp.ne.s32.totalorder %s21, %s22
    %p36 = scmp.eq.s32.totalorder %s14, 1
    %p37 = por %p35, %p36
    %p39 = scmp.ne.s32.totalorder %s22, %s38
    %p40 = scmp.eq.s32.totalorder %s14, 0
    %p41 = por %p39, %p40
    %s43 = sadd.s32 %s42, 1
    %p46 = scmp.eq.s32.totalorder %s8, 1
    %p47 = scmp.ne.s32.totalorder %s42, %s44
    %p48 = scmp.eq.s32.totalorder %s8, 0
    %p49 = por %p47, %p48
    %p50 = scmp.ne.s32.totalorder %s42, %s44
    %p51 = scmp.eq.s32.totalorder %s13, 1
    %p52 = por %p50, %p51
    %p53 = scmp.ne.s32.totalorder %s44, %s45
    %p54 = scmp.eq.s32.totalorder %s13, 0
    %p55 = por %p53, %p54
    %p56 = scmp.ne.s32.totalorder %s44, %s45
    %p57 = scmp.eq.s32.totalorder %s14, 1
    %p58 = por %p56, %p57
    %p60 = scmp.ne.s32.totalorder %s45, %s59
    %p61 = scmp.eq.s32.totalorder %s14, 0
    %p62 = por %p60, %p61
    %s63 = ssub.s32 %s8, %s15
    %p64 = scmp.eq.s32.totalorder %s63, 0
    %s66 = sadd.s32 %s65, 1
    %s67 = scalar_select %p64, %s65, %s66
    %p70 = pneg %p64
    %p71 = scmp.eq.s32.totalorder %s8, 1
    %p72 = por %p70, %p71
    %p73 = scmp.ne.s32.totalorder %s65, %s68
    %p74 = scmp.eq.s32.totalorder %s8, 0
    %p75 = por %p73, %p74
    %p76 = scmp.ne.s32.totalorder %s65, %s68
    %p77 = scmp.eq.s32.totalorder %s13, 1
    %p78 = por %p76, %p77
    %p79 = scmp.ne.s32.totalorder %s68, %s69
    %p80 = scmp.eq.s32.totalorder %s13, 0
    %p81 = por %p79, %p80
    %p82 = scmp.ne.s32.totalorder %s68, %s69
    %p83 = scmp.eq.s32.totalorder %s14, 1
    %p84 = por %p82, %p83
    %p86 = scmp.ne.s32.totalorder %s69, %s85
    %p87 = scmp.eq.s32.totalorder %s14, 0
    %p88 = por %p86, %p87
    %p89 = scmp.le.s32.totalorder 1, %s8
    %p90 = scmp.lt.s32.totalorder %s8, 3
    %p91 = pnand %p89, %p90
    %p92 = pneg %p91
    // Predicated region
    $region9: #{gcn_layer.2} parent=5 // pred_check
      _
    $region10: #{gcn_layer.2} parent=5 // pred_check_branch
      %94 = sbr.rel (%p91) target = $region12
    $region11: #{gcn_layer.2} parent=5 // pred_region
      %s95 = ssub.s32 %s8, 1
      // Predicated region
      $region13: #{gcn_layer.2} parent=11 // pred_check
        %p96 = pneg %p55
      $region14: #{gcn_layer.2} parent=11 // pred_check_branch
        %98 = sbr.rel (%p96) target = $region16
      $region15: #{gcn_layer.2} parent=11 // pred_region
        _
      $region16: #{gcn_layer.2} parent=11 // pred_fallthru
        _
    $region12: #{gcn_layer.2} parent=5 // pred_fallthru
      _
    %p99 = scmp.lt.s32.totalorder %s8, 2
    // Predicated region
    $region17: #{gcn_layer.2} parent=5 // pred_check
      %p100 = pneg %p99
    $region18: #{gcn_layer.2} parent=5 // pred_check_branch
      %102 = sbr.rel (%p100) target = $region20
    $region19: #{gcn_layer.2} parent=5 // pred_region
      // Predicated region
      $region21: #{gcn_layer.2} parent=19 // pred_check
        %p103 = pneg %p28
      $region22: #{gcn_layer.2} parent=19 // pred_check_branch
        %105 = sbr.rel (%p103) target = $region24
      $region23: #{gcn_layer.2} parent=19 // pred_region
        %s106 = smul.u32 16, %s8
        %p107 = scmp.lt.s32.totalorder %s106, 31
        %s108 = scalar_select %p107, %s106, 31
        %s109 = smul.addr %s108, 8
        %s110 = scalar_lea.vmem %s0, %s109
        %s111 = smul.u32 16, %s8
      $region24: #{gcn_layer.2} parent=19 // pred_fallthru
        _
    $region20: #{gcn_layer.2} parent=5 // pred_fallthru
      _
    %p112 = scmp.le.s32.totalorder 1, %s8
    %p113 = scmp.lt.s32.totalorder %s8, 3
    %p114 = pnand %p112, %p113
    %p115 = pneg %p114
    // Predicated region
    $region25: #{gcn_layer.2} parent=5 // pred_check
      _
    $region26: #{gcn_layer.2} parent=5 // pred_check_branch
      %117 = sbr.rel (%p114) target = $region28
    $region27: #{gcn_layer.2} parent=5 // pred_region
      %s118 = ssub.s32 %s8, 1
      %s119 = smul.u32 16, %s13
      %p120 = scmp.lt.s32.totalorder %s119, 31
      %s121 = scalar_select %p120, %s119, 31
      %s122 = smul.addr %s121, 8
      %s123 = scalar_lea.vmem %s0, %s122
      %p124 = pneg %p34
      %p125 = pneg %p31
      %p126 = pneg %p55
      %p127 = pneg %p52
      %p128 = pneg %p81
      %p129 = pneg %p78
      %s130 = smul.u32 16, %s13
      %p131 = scmp.lt.s32.totalorder %s130, 31
      %s132 = scalar_select %p131, %s130, 31
      %s133 = smul.addr %s132, 4
      %s134 = scalar_lea.vmem %s2, %s133
      %s135 = smul.u32 16, %s13
      %p136 = scmp.lt.s32.totalorder %s135, 31
      %s137 = scalar_select %p136, %s135, 31
      %s138 = smul.addr %s137, 8
      %s139 = scalar_lea.vmem %s0, %s138
      %s140 = smul.u32 16, %s13
      %s141 = smul.u32 16, %s13
      %p142 = scmp.lt.s32.totalorder %s141, 31
      %s143 = scalar_select %p142, %s141, 31
      %s144 = smul.addr %s143, 4
      %s145 = scalar_lea.vmem %s2, %s144
      %s146 = smul.u32 16, %s13
      %v147 = vld [vmem:[%s139] sm:$0xff]
      %v148 = vld [vmem:[%s139 + $0x8] sm:$0xff]
      %v149 = vld [vmem:[%s139 + $0x10] sm:$0xff]
      %v150 = vld [vmem:[%s139 + $0x18] sm:$0xff]
      %v151 = vld [vmem:[%s139 + $0x20] sm:$0xff]
      %v152 = vld [vmem:[%s139 + $0x28] sm:$0xff]
      %v153 = vld [vmem:[%s139 + $0x30] sm:$0xff]
      %v154 = vld [vmem:[%s139 + $0x38] sm:$0xff]
      %v155 = vld [vmem:[%s139 + $0x40] sm:$0xff]
      %v156 = vld [vmem:[%s139 + $0x48] sm:$0xff]
      %v157 = vld [vmem:[%s139 + $0x50] sm:$0xff]
      %v158 = vld [vmem:[%s139 + $0x58] sm:$0xff]
      %v159 = vld [vmem:[%s139 + $0x60] sm:$0xff]
      %v160 = vld [vmem:[%s139 + $0x68] sm:$0xff]
      %v161 = vld [vmem:[%s139 + $0x70] sm:$0xff]
      %v162 = vld [vmem:[%s139 + $0x78] sm:$0xff]
      %v163 = vld [vmem:[%s1] sm:$0xff]
      %v164 = vld [vmem:[%s1 + $0x8] sm:$0xff]
      %v165 = vld [vmem:[%s1 + $0x10] sm:$0xff]
      %v166 = vld [vmem:[%s1 + $0x18] sm:$0xff]
      %vm167 = vcmask 261120
      %v169 = vsel %vm167, %v147, 0
      %v172 = vsel %vm167, %v148, 0
      %v175 = vsel %vm167, %v149, 0
      %v178 = vsel %vm167, %v150, 0
      %v181 = vsel %vm167, %v151, 0
      %v184 = vsel %vm167, %v152, 0
      %v187 = vsel %vm167, %v153, 0
      %v190 = vsel %vm167, %v154, 0
      %v193 = vsel %vm167, %v155, 0
      %v196 = vsel %vm167, %v156, 0
      %v199 = vsel %vm167, %v157, 0
      %v202 = vsel %vm167, %v158, 0
      %v205 = vsel %vm167, %v159, 0
      %v208 = vsel %vm167, %v160, 0
      %v211 = vsel %vm167, %v161, 0
      %v214 = vsel %vm167, %v162, 0
      %216 = vmatprep.subr.mxu0 0.0
      %217 = vmatpush1.msra.mxu0 0.0
      %218 = vmatprep.subr.mxu0 0.0
      %219 = vmatpush1.msra.mxu0 0.0
      %220 = vmatprep.subr.mxu0 0.0
      %221 = vmatpush1.msra.mxu0 0.0
      %222 = vmatprep.subr.mxu0 0.0
      %223 = vmatpush1.msra.mxu0 0.0
      %224 = vmatprep.subr.mxu0 0.0
      %225 = vmatpush1.msra.mxu0 0.0
      %226 = vmatprep.subr.mxu0 0.0
      %227 = vmatpush1.msra.mxu0 0.0
      %228 = vmatprep.subr.mxu0 0.0
      %229 = vmatpush1.msra.mxu0 0.0
      %230 = vmatprep.subr.mxu0 0.0
      %231 = vmatpush1.msra.mxu0 0.0
      %232 = vmatprep.subr.mxu0 0.0
      %233 = vmatpush1.msra.mxu0 0.0
      %234 = vmatprep.subr.mxu0 0.0
      %235 = vmatpush1.msra.mxu0 0.0
      %236 = vmatprep.subr.mxu0 0.0
      %237 = vmatpush1.msra.mxu0 0.0
      %238 = vmatprep.subr.mxu0 0.0
      %239 = vmatpush1.msra.mxu0 0.0
      %240 = vmatprep.subr.mxu0 0.0
      %241 = vmatpush1.msra.mxu0 %v166
      %242 = vmatprep.subr.mxu0 0.0
      %243 = vmatpush1.msra.mxu0 %v165
      %244 = vmatprep.subr.mxu0 0.0
      %245 = vmatpush1.msra.mxu0 %v164
      %246 = vmatprep.subr.mxu0 0.0
      %247 = vmatpush1.msra.mxu0 %v163
      %248 = vmatprep.subr.mxu0 0.0
      %249 = vmatpush2.msra.mxu0 0.0
      %250 = vmatprep.subr.mxu0 0.0
      %251 = vmatpush2.msra.mxu0 0.0
      %252 = vmatprep.subr.mxu0 0.0
      %253 = vmatpush2.msra.mxu0 0.0
      %254 = vmatprep.subr.mxu0 0.0
      %255 = vmatpush2.msra.mxu0 0.0
      %256 = vmatprep.subr.mxu0 0.0
      %257 = vmatpush2.msra.mxu0 0.0
      %258 = vmatprep.subr.mxu0 0.0
      %259 = vmatpush2.msra.mxu0 0.0
      %260 = vmatprep.subr.mxu0 0.0
      %261 = vmatpush2.msra.mxu0 0.0
      %262 = vmatprep.subr.mxu0 0.0
      %263 = vmatpush2.msra.mxu0 0.0
      %264 = vmatprep.subr.mxu0 0.0
      %265 = vmatpush2.msra.mxu0 0.0
      %266 = vmatprep.subr.mxu0 0.0
      %267 = vmatpush2.msra.mxu0 0.0
      %268 = vmatprep.subr.mxu0 0.0
      %269 = vmatpush2.msra.mxu0 0.0
      %270 = vmatprep.subr.mxu0 0.0
      %271 = vmatpush2.msra.mxu0 0.0
      %272 = vmatprep.subr.mxu0 0.0
      %273 = vmatpush2.msra.mxu0 0.0
      %274 = vmatprep.subr.mxu0 0.0
      %275 = vmatpush2.msra.mxu0 0.0
      %276 = vmatprep.subr.mxu0 0.0
      %277 = vmatpush2.msra.mxu0 0.0
      %278 = vmatprep.subr.mxu0 0.0
      %279 = vmatpush2.msra.mxu0 0.0
      %280 = vmatprep.mubr.f32.mxu0 0.0
      %281 = vmatmul.mubr.f32.gmra.mxu0 %v169
      %v282 = vpop.f32.mrf.mxu0
      %v283 = vadd.f32 0.0, %v282
      %v284 = vpop.f32.mrf.mxu0
      %285 = vmatprep.mubr.f32.mxu0 0.0
      %286 = vmatmul.mubr.f32.gmra.mxu0 %v172
      %v287 = vpop.f32.mrf.mxu0
      %v288 = vadd.f32 0.0, %v287
      %v289 = vpop.f32.mrf.mxu0
      %290 = vmatprep.mubr.f32.mxu0 0.0
      %291 = vmatmul.mubr.f32.gmra.mxu0 %v175
      %v292 = vpop.f32.mrf.mxu0
      %v293 = vadd.f32 0.0, %v292
      %v294 = vpop.f32.mrf.mxu0
      %295 = vmatprep.mubr.f32.mxu0 0.0
      %296 = vmatmul.mubr.f32.gmra.mxu0 %v178
      %v297 = vpop.f32.mrf.mxu0
      %v298 = vadd.f32 0.0, %v297
      %v299 = vpop.f32.mrf.mxu0
      %300 = vmatprep.mubr.f32.mxu0 0.0
      %301 = vmatmul.mubr.f32.gmra.mxu0 %v181
      %v302 = vpop.f32.mrf.mxu0
      %v303 = vadd.f32 0.0, %v302
      %v304 = vpop.f32.mrf.mxu0
      %305 = vmatprep.mubr.f32.mxu0 0.0
      %306 = vmatmul.mubr.f32.gmra.mxu0 %v184
      %v307 = vpop.f32.mrf.mxu0
      %v308 = vadd.f32 0.0, %v307
      %v309 = vpop.f32.mrf.mxu0
      %310 = vmatprep.mubr.f32.mxu0 0.0
      %311 = vmatmul.mubr.f32.gmra.mxu0 %v187
      %v312 = vpop.f32.mrf.mxu0
      %v313 = vadd.f32 0.0, %v312
      %v314 = vpop.f32.mrf.mxu0
      %315 = vmatprep.mubr.f32.mxu0 0.0
      %316 = vmatmul.mubr.f32.gmra.mxu0 %v190
      %v317 = vpop.f32.mrf.mxu0
      %v318 = vadd.f32 0.0, %v317
      %v319 = vpop.f32.mrf.mxu0
      %320 = vmatprep.mubr.f32.mxu0 0.0
      %321 = vmatmul.mubr.f32.gmra.mxu0 %v193
      %v322 = vpop.f32.mrf.mxu0
      %v323 = vadd.f32 0.0, %v322
      %v324 = vpop.f32.mrf.mxu0
      %325 = vmatprep.mubr.f32.mxu0 0.0
      %326 = vmatmul.mubr.f32.gmra.mxu0 %v196
      %v327 = vpop.f32.mrf.mxu0
      %v328 = vadd.f32 0.0, %v327
      %v329 = vpop.f32.mrf.mxu0
      %330 = vmatprep.mubr.f32.mxu0 0.0
      %331 = vmatmul.mubr.f32.gmra.mxu0 %v199
      %v332 = vpop.f32.mrf.mxu0
      %v333 = vadd.f32 0.0, %v332
      %v334 = vpop.f32.mrf.mxu0
      %335 = vmatprep.mubr.f32.mxu0 0.0
      %336 = vmatmul.mubr.f32.gmra.mxu0 %v202
      %v337 = vpop.f32.mrf.mxu0
      %v338 = vadd.f32 0.0, %v337
      %v339 = vpop.f32.mrf.mxu0
      %340 = vmatprep.mubr.f32.mxu0 0.0
      %341 = vmatmul.mubr.f32.gmra.mxu0 %v205
      %v342 = vpop.f32.mrf.mxu0
      %v343 = vadd.f32 0.0, %v342
      %v344 = vpop.f32.mrf.mxu0
      %345 = vmatprep.mubr.f32.mxu0 0.0
      %346 = vmatmul.mubr.f32.gmra.mxu0 %v208
      %v347 = vpop.f32.mrf.mxu0
      %v348 = vadd.f32 0.0, %v347
      %v349 = vpop.f32.mrf.mxu0
      %350 = vmatprep.mubr.f32.mxu0 0.0
      %351 = vmatmul.mubr.f32.gmra.mxu0 %v211
      %v352 = vpop.f32.mrf.mxu0
      %v353 = vadd.f32 0.0, %v352
      %v354 = vpop.f32.mrf.mxu0
      %355 = vmatprep.mubr.f32.mxu0 0.0
      %356 = vmatmul.mubr.f32.gmra.mxu0 %v214
      %v357 = vpop.f32.mrf.mxu0
      %v358 = vadd.f32 0.0, %v357
      %v359 = vpop.f32.mrf.mxu0
      %360 = vdwg.mxu0
      %v361 = vpack.c.bf16 %v288, %v283
      %v362 = vpack.c.bf16 %v298, %v293
      %v363 = vpack.c.bf16 %v308, %v303
      %v364 = vpack.c.bf16 %v318, %v313
      %v365 = vpack.c.bf16 %v328, %v323
      %v366 = vpack.c.bf16 %v338, %v333
      %v367 = vpack.c.bf16 %v348, %v343
      %v368 = vpack.c.bf16 %v358, %v353
      %v377 = vunpack.c.l.b16 %v361
      %v378 = vunpack.c.h.b16 %v361
      %v379 = vunpack.c.l.b16 %v362
      %v380 = vunpack.c.h.b16 %v362
      %v381 = vunpack.c.l.b16 %v363
      %v382 = vunpack.c.h.b16 %v363
      %v383 = vunpack.c.l.b16 %v364
      %v384 = vunpack.c.h.b16 %v364
      %v385 = vunpack.c.l.b16 %v365
      %v386 = vunpack.c.h.b16 %v365
      %v387 = vunpack.c.l.b16 %v366
      %v388 = vunpack.c.h.b16 %v366
      %v389 = vunpack.c.l.b16 %v367
      %v390 = vunpack.c.h.b16 %v367
      %v391 = vunpack.c.l.b16 %v368
      %v392 = vunpack.c.h.b16 %v368
      %v393 = vpack.c.b16 %v377, %v377
      %v394 = vpack.c.b16 %v378, %v378
      %v395 = vpack.c.b16 %v379, %v379
      %v396 = vpack.c.b16 %v380, %v380
      %v397 = vpack.c.b16 %v381, %v381
      %v398 = vpack.c.b16 %v382, %v382
      %v399 = vpack.c.b16 %v383, %v383
      %v400 = vpack.c.b16 %v384, %v384
      %v401 = vpack.c.b16 %v385, %v385
      %v402 = vpack.c.b16 %v386, %v386
      %v403 = vpack.c.b16 %v387, %v387
      %v404 = vpack.c.b16 %v388, %v388
      %v405 = vpack.c.b16 %v389, %v389
      %v406 = vpack.c.b16 %v390, %v390
      %v407 = vpack.c.b16 %v391, %v391
      %v408 = vpack.c.b16 %v392, %v392
      %425 = vst [vmem:[%s145] sm:$0xf] %v393
      %426 = vst [vmem:[%s145 + $0x4] sm:$0xf] %v394
      %427 = vst [vmem:[%s145 + $0x8] sm:$0xf] %v395
      %428 = vst [vmem:[%s145 + $0xc] sm:$0xf] %v396
      %429 = vst [vmem:[%s145 + $0x10] sm:$0xf] %v397
      %430 = vst [vmem:[%s145 + $0x14] sm:$0xf] %v398
      %431 = vst [vmem:[%s145 + $0x18] sm:$0xf] %v399
      %432 = vst [vmem:[%s145 + $0x1c] sm:$0xf] %v400
      %433 = vst [vmem:[%s145 + $0x20] sm:$0xf] %v401
      %434 = vst [vmem:[%s145 + $0x24] sm:$0xf] %v402
      %435 = vst [vmem:[%s145 + $0x28] sm:$0xf] %v403
      %436 = vst [vmem:[%s145 + $0x2c] sm:$0xf] %v404
      %437 = vst [vmem:[%s145 + $0x30] sm:$0xf] %v405
      %438 = vst [vmem:[%s145 + $0x34] sm:$0xf] %v406
      %439 = vst [vmem:[%s145 + $0x38] sm:$0xf] %v407
      %440 = vst [vmem:[%s145 + $0x3c] sm:$0xf] %v408
      %s441 = smul.u32 16, %s13
      %p442 = scmp.lt.s32.totalorder %s441, 31
      %s443 = scalar_select %p442, %s441, 31
      %s444 = smul.addr %s443, 4
      %s445 = scalar_lea.vmem %s2, %s444
      // Predicated region
      $region29: #{gcn_layer.2} parent=27 // pred_check
        %p446 = pneg %p78
      $region30: #{gcn_layer.2} parent=27 // pred_check_branch
        %448 = sbr.rel (%p446) target = $region32
      $region31: #{gcn_layer.2} parent=27 // pred_region
        %s449 = smul.u32 16, %s13
      $region32: #{gcn_layer.2} parent=27 // pred_fallthru
        _
    $region28: #{gcn_layer.2} parent=5 // pred_fallthru
      _
    %p450 = scmp.le.s32.totalorder 2, %s8
    // Predicated region
    $region33: #{gcn_layer.2} parent=5 // pred_check
      %p451 = pneg %p450
    $region34: #{gcn_layer.2} parent=5 // pred_check_branch
      %453 = sbr.rel (%p451) target = $region36
    $region35: #{gcn_layer.2} parent=5 // pred_region
      %s454 = ssub.s32 %s8, 2
      // Predicated region
      $region37: #{gcn_layer.2} parent=35 // pred_check
        %p455 = pneg %p84
      $region38: #{gcn_layer.2} parent=35 // pred_check_branch
        %457 = sbr.rel (%p455) target = $region40
      $region39: #{gcn_layer.2} parent=35 // pred_region
        %s458 = smul.u32 16, %s14
        %p459 = scmp.lt.s32.totalorder %s458, 31
        %s460 = scalar_select %p459, %s458, 31
        %s461 = smul.addr %s460, 4
        %s462 = scalar_lea.vmem %s2, %s461
      $region40: #{gcn_layer.2} parent=35 // pred_fallthru
        _
    $region36: #{gcn_layer.2} parent=5 // pred_fallthru
      _
  $region6: #{gcn_layer.2} parent=0 // loop_footer
    %s12 = sadd.s32 1, %s8
  $region7: #{gcn_layer.2} parent=0 // loop_footer_branch
    %7 = sbr.rel target = $region3
  $region8: #{gcn_layer.2} parent=0 // loop_exit
    _

</llo_original>
